<compile_context>
chip_gen: v7x
topology: tpu7x:2x2x1
jax: 0.10.0
libtpu: 0.0.40
codegen_flags: <defaults>
</compile_context>

<pallas_src>
import functools

import jax
import jax.numpy as jnp
from jax.experimental import pallas as pl
from jax.experimental.pallas import tpu as pltpu

LN_EPS = 1e-5           # PyTorch nn.LayerNorm default
HEAD_DIM = 32           # per-branch head width (hardcoded to 32 in the PyTorch spec)
CAT_DIM = 2 * HEAD_DIM  # 64 = LayerNorm(64) input of mlp_head
LANE = 128


def _normalize(x):
    # LayerNorm core (biased variance, eps inside rsqrt); affine is folded into
    # the following linear layer host-side.
    mu = jnp.mean(x, axis=-1, keepdims=True)
    var = jnp.mean((x - mu) ** 2, axis=-1, keepdims=True)
    return (x - mu) * jax.lax.rsqrt(var + LN_EPS)


def ensemble_head_kernel(
    spike_ref, lfp_ref,   # (B, Hs), (B, Hl) embeddings
    w_blk_ref,            # (Hs+Hl+1, 64): rows 0..Hs+Hl-1 = blockdiag(g_s*w_s, g_l*w_l),
                          #                 last row = [b_s@w_s+bl_s | b_l@w_l+bl_l]
    wout_ref,             # (65, Lp): rows 0..63 = padded g_h*w_h, row 64 = padded b_h@w_h+bl_h
    out_ref,              # (B, Lp)
    *, hs, hl,
):
    cat = hs + hl

    # Per-branch LayerNorm normalization (affine folded into w_blk).
    xs = _normalize(spike_ref[...])
    xl = _normalize(lfp_ref[...])

    # Lane-aligned concat (both branches full 128-lane tiles), then ONE
    # block-diagonal matmul produces torch.cat((xs, xl), dim=1) directly.
    x = jnp.concatenate([xs, xl], axis=-1)                            # (B, Hs+Hl)
    x = (
        jnp.dot(x, w_blk_ref[0:cat, :], preferred_element_type=jnp.float32)
        + w_blk_ref[cat:cat + 1, :]
    )                                                                 # (B, 64)

    # mlp_head: LayerNorm(64) (affine folded) + Linear(64, Lp).
    x = _normalize(x)
    out_ref[...] = (
        jnp.dot(x, wout_ref[0:CAT_DIM, :], preferred_element_type=jnp.float32)
        + wout_ref[CAT_DIM:CAT_DIM + 1, :]
    )


def pack_params(params):
    """Fold LN affines into the following linears and pack the head into 2 slabs."""
    hs = params["g_s"].shape[1]
    hl = params["g_l"].shape[1]
    num_labels = params["w_h"].shape[1]
    lp = max(LANE, -(-num_labels // LANE) * LANE)   # pad labels up to a lane tile

    # Branch linears with LN gamma folded into the weight rows, LN beta + bias fused.
    w_s_f = params["g_s"].T * params["w_s"]                          # (Hs, 32)
    w_l_f = params["g_l"].T * params["w_l"]                          # (Hl, 32)
    b_s_f = params["b_s"] @ params["w_s"] + params["bl_s"]           # (1, 32)
    b_l_f = params["b_l"] @ params["w_l"] + params["bl_l"]           # (1, 32)

    w_blk = jnp.zeros((hs + hl + 1, CAT_DIM), jnp.float32)
    w_blk = w_blk.at[:hs, :HEAD_DIM].set(w_s_f)
    w_blk = w_blk.at[hs:hs + hl, HEAD_DIM:].set(w_l_f)               # blockdiag
    w_blk = w_blk.at[hs + hl, :HEAD_DIM].set(b_s_f[0])
    w_blk = w_blk.at[hs + hl, HEAD_DIM:].set(b_l_f[0])               # fused bias row

    # Output linear with head-LN gamma folded in, beta + bias fused; lane-padded.
    w_h_f = params["g_h"].T * params["w_h"]                          # (64, L)
    b_h_f = params["b_h"] @ params["w_h"] + params["bl_h"]           # (1, L)
    wout = jnp.zeros((CAT_DIM + 1, lp), jnp.float32)
    wout = wout.at[:CAT_DIM, :num_labels].set(w_h_f)
    wout = wout.at[CAT_DIM, :num_labels].set(b_h_f[0])

    return {"w_blk": w_blk, "wout": wout,
            "hs": hs, "hl": hl, "num_labels": num_labels, "lp": lp}


def ensemble_head(spike_emb, lfp_emb, packed):
    """Fused ensemble head. spike_emb: (B, Hs), lfp_emb: (B, Hl) -> (B, num_labels)."""
    B = spike_emb.shape[0]
    hs, hl = packed["hs"], packed["hl"]
    lp, num_labels = packed["lp"], packed["num_labels"]

    kernel = functools.partial(ensemble_head_kernel, hs=hs, hl=hl)

    # No grid: whole problem is one tile; full-array VMEM blocks, no pipeline
    # machinery, no double buffering.  Total resident footprint ~110 KiB.
    vmem = pl.BlockSpec(memory_space=pltpu.MemorySpace.VMEM)

    flops = 2 * B * ((hs + hl) * CAT_DIM + CAT_DIM * lp)
    bytes_accessed = 4 * (
        B * hs + B * hl                 # embeddings
        + (hs + hl + 1) * CAT_DIM       # block-diagonal weight + fused bias row
        + (CAT_DIM + 1) * lp            # padded output weight + fused bias row
        + B * lp                        # output
    )

    out_padded = pl.pallas_call(
        kernel,
        out_shape=jax.ShapeDtypeStruct((B, lp), jnp.float32),
        in_specs=[vmem] * 4,
        out_specs=vmem,
        cost_estimate=pl.CostEstimate(
            flops=flops, transcendentals=0, bytes_accessed=bytes_accessed
        ),
    )(spike_emb, lfp_emb, packed["w_blk"], packed["wout"])
    return out_padded[:, :num_labels]


def init_params(key, hidden_spike, hidden_lfp, num_labels):
    """Deterministic parameter init for the three MLP heads (PyTorch layout: (in, out))."""
    ks = jax.random.split(key, 6)
    scale = 0.02
    params = {
        # mlp_head_spike: LayerNorm(Hs) + Linear(Hs, 32)
        "g_s": jnp.ones((1, hidden_spike), jnp.float32),
        "b_s": jnp.zeros((1, hidden_spike), jnp.float32),
        "w_s": scale * jax.random.normal(ks[0], (hidden_spike, HEAD_DIM), jnp.float32),
        "bl_s": scale * jax.random.normal(ks[1], (1, HEAD_DIM), jnp.float32),
        # mlp_head_lfp: LayerNorm(Hl) + Linear(Hl, 32)
        "g_l": jnp.ones((1, hidden_lfp), jnp.float32),
        "b_l": jnp.zeros((1, hidden_lfp), jnp.float32),
        "w_l": scale * jax.random.normal(ks[2], (hidden_lfp, HEAD_DIM), jnp.float32),
        "bl_l": scale * jax.random.normal(ks[3], (1, HEAD_DIM), jnp.float32),
        # mlp_head: LayerNorm(64) + Linear(64, num_labels)
        "g_h": jnp.ones((1, CAT_DIM), jnp.float32),
        "b_h": jnp.zeros((1, CAT_DIM), jnp.float32),
        "w_h": scale * jax.random.normal(ks[4], (CAT_DIM, num_labels), jnp.float32),
        "bl_h": scale * jax.random.normal(ks[5], (1, num_labels), jnp.float32),
    }
    return params


def standin_encoder(x, w):
    """Deterministic stand-in for the external spike/lfp sub-models (plain JAX glue).

    x: (B, C, T) raw signal -> mean-pool over T -> linear to hidden.
    """
    pooled = jnp.mean(x, axis=-1)          # (B, C)
    return pooled @ w                      # (B, hidden)


def ensemble_forward(lfp, spike, enc_w_lfp, enc_w_spike, params):
    """Mirrors Ensemble.forward for the (spike_model and lfp_model) branch."""
    spike_emb = standin_encoder(spike, enc_w_spike)
    lfp_emb = standin_encoder(lfp, enc_w_lfp)
    packed = pack_params(params)
    combined_emb = ensemble_head(spike_emb, lfp_emb, packed)
    return spike_emb, lfp_emb, combined_emb


def reference_head(spike_emb, lfp_emb, params):
    """Pure-JAX reference (original un-folded formulation) for correctness check."""
    def ln(x, g, b):
        mu = jnp.mean(x, axis=-1, keepdims=True)
        var = jnp.mean((x - mu) ** 2, axis=-1, keepdims=True)
        return (x - mu) * jax.lax.rsqrt(var + LN_EPS) * g + b

    xs = ln(spike_emb, params["g_s"], params["b_s"]) @ params["w_s"] + params["bl_s"]
    xl = ln(lfp_emb, params["g_l"], params["b_l"]) @ params["w_l"] + params["bl_l"]
    x = jnp.concatenate([xs, xl], axis=-1)
    x = ln(x, params["g_h"], params["b_h"])
    return x @ params["w_h"] + params["bl_h"]


if __name__ == "__main__":
    key = jax.random.PRNGKey(0)
    k_lfp, k_spike, k_ewl, k_ews, k_params = jax.random.split(key, 5)

    B, C, T = 8, 4, 16
    hidden_size_lfp = 128
    hidden_size_spike = 128
    num_labels = 8

    lfp = jax.random.normal(k_lfp, (B, C, T), jnp.float32)
    spike = jax.random.normal(k_spike, (B, C, T), jnp.float32)

    enc_w_lfp = 0.1 * jax.random.normal(k_ewl, (C, hidden_size_lfp), jnp.float32)
    enc_w_spike = 0.1 * jax.random.normal(k_ews, (C, hidden_size_spike), jnp.float32)
    params = init_params(k_params, hidden_size_spike, hidden_size_lfp, num_labels)

    spike_emb, lfp_emb, combined = ensemble_forward(
        lfp, spike, enc_w_lfp, enc_w_spike, params
    )
    jax.block_until_ready(combined)

    ref = reference_head(spike_emb, lfp_emb, params)
    assert combined.shape == (B, num_labels)
    assert jnp.allclose(combined, ref, atol=1e-4, rtol=1e-4), "mismatch vs reference"

    print("KERNEL_OK")
</pallas_src>

<mosaic_0001>
module attributes {stable_mosaic.version = 11 : i64} {
  func.func @ensemble_head_kernel(%arg0: memref<8x128xf32, #tpu.memory_space<vmem>>, %arg1: memref<8x128xf32, #tpu.memory_space<vmem>>, %arg2: memref<257x64xf32, #tpu.memory_space<vmem>>, %arg3: memref<65x128xf32, #tpu.memory_space<vmem>>, %arg4: memref<8x128xf32, #tpu.memory_space<vmem>>) attributes {dimension_semantics = [], scalar_prefetch = 0 : i64, scratch_operands = 0 : i64, tpu.core_type = #tpu.core_type<tc>} {
    %c0 = arith.constant 0 : index
    %c0_0 = arith.constant 0 : index
    %0 = vector.load %arg0[%c0, %c0_0] : memref<8x128xf32, #tpu.memory_space<vmem>>, vector<8x128xf32>
    %cst = arith.constant dense<0.000000e+00> : vector<8xf32>
    %1 = vector.multi_reduction <add>, %0, %cst [1] : vector<8x128xf32> to vector<8xf32>
    %2 = vector.shape_cast %1 : vector<8xf32> to vector<8x1xf32>
    %cst_1 = arith.constant 1.280000e+02 : f32
    %3 = vector.broadcast %cst_1 : f32 to vector<8x1xf32>
    %4 = arith.divf %2, %3 : vector<8x1xf32>
    %5 = vector.broadcast %4 : vector<8x1xf32> to vector<8x128xf32>
    %6 = arith.subf %0, %5 : vector<8x128xf32>
    %7 = arith.mulf %6, %6 : vector<8x128xf32>
    %cst_2 = arith.constant dense<0.000000e+00> : vector<8xf32>
    %8 = vector.multi_reduction <add>, %7, %cst_2 [1] : vector<8x128xf32> to vector<8xf32>
    %9 = vector.shape_cast %8 : vector<8xf32> to vector<8x1xf32>
    %cst_3 = arith.constant 1.280000e+02 : f32
    %10 = vector.broadcast %cst_3 : f32 to vector<8x1xf32>
    %11 = arith.divf %9, %10 : vector<8x1xf32>
    %12 = vector.broadcast %4 : vector<8x1xf32> to vector<8x128xf32>
    %13 = arith.subf %0, %12 : vector<8x128xf32>
    %cst_4 = arith.constant 9.99999974E-6 : f32
    %14 = vector.broadcast %cst_4 : f32 to vector<8x1xf32>
    %15 = arith.addf %11, %14 : vector<8x1xf32>
    %16 = math.rsqrt %15 : vector<8x1xf32>
    %17 = vector.broadcast %16 : vector<8x1xf32> to vector<8x128xf32>
    %18 = arith.mulf %13, %17 : vector<8x128xf32>
    %c0_5 = arith.constant 0 : index
    %c0_6 = arith.constant 0 : index
    %19 = vector.load %arg1[%c0_5, %c0_6] : memref<8x128xf32, #tpu.memory_space<vmem>>, vector<8x128xf32>
    %cst_7 = arith.constant dense<0.000000e+00> : vector<8xf32>
    %20 = vector.multi_reduction <add>, %19, %cst_7 [1] : vector<8x128xf32> to vector<8xf32>
    %21 = vector.shape_cast %20 : vector<8xf32> to vector<8x1xf32>
    %cst_8 = arith.constant 1.280000e+02 : f32
    %22 = vector.broadcast %cst_8 : f32 to vector<8x1xf32>
    %23 = arith.divf %21, %22 : vector<8x1xf32>
    %24 = vector.broadcast %23 : vector<8x1xf32> to vector<8x128xf32>
    %25 = arith.subf %19, %24 : vector<8x128xf32>
    %26 = arith.mulf %25, %25 : vector<8x128xf32>
    %cst_9 = arith.constant dense<0.000000e+00> : vector<8xf32>
    %27 = vector.multi_reduction <add>, %26, %cst_9 [1] : vector<8x128xf32> to vector<8xf32>
    %28 = vector.shape_cast %27 : vector<8xf32> to vector<8x1xf32>
    %cst_10 = arith.constant 1.280000e+02 : f32
    %29 = vector.broadcast %cst_10 : f32 to vector<8x1xf32>
    %30 = arith.divf %28, %29 : vector<8x1xf32>
    %31 = vector.broadcast %23 : vector<8x1xf32> to vector<8x128xf32>
    %32 = arith.subf %19, %31 : vector<8x128xf32>
    %cst_11 = arith.constant 9.99999974E-6 : f32
    %33 = vector.broadcast %cst_11 : f32 to vector<8x1xf32>
    %34 = arith.addf %30, %33 : vector<8x1xf32>
    %35 = math.rsqrt %34 : vector<8x1xf32>
    %36 = vector.broadcast %35 : vector<8x1xf32> to vector<8x128xf32>
    %37 = arith.mulf %32, %36 : vector<8x128xf32>
    %38 = tpu.concatenate %18, %37 in 1 : vector<8x128xf32>, vector<8x128xf32> -> vector<8x256xf32>
    %c0_12 = arith.constant 0 : index
    %c0_13 = arith.constant 0 : index
    %39 = vector.load %arg2[%c0_12, %c0_13] : memref<257x64xf32, #tpu.memory_space<vmem>>, vector<256x64xf32>
    %cst_14 = arith.constant dense<0.000000e+00> : vector<8x64xf32>
    %40 = tpu.matmul %38, %39, %cst_14 {dimension_numbers = #tpu.dot_dimension_numbers<[1], [0], [0], [1], [0, 0, 1, 1], [], []>} : vector<8x256xf32>, vector<256x64xf32>, vector<8x64xf32> -> vector<8x64xf32>
    %c256 = arith.constant 256 : index
    %c0_15 = arith.constant 0 : index
    %41 = vector.load %arg2[%c256, %c0_15] : memref<257x64xf32, #tpu.memory_space<vmem>>, vector<1x64xf32>
    %42 = vector.broadcast %41 : vector<1x64xf32> to vector<8x64xf32>
    %43 = arith.addf %40, %42 : vector<8x64xf32>
    %cst_16 = arith.constant dense<0.000000e+00> : vector<8xf32>
    %44 = vector.multi_reduction <add>, %43, %cst_16 [1] : vector<8x64xf32> to vector<8xf32>
    %45 = vector.shape_cast %44 : vector<8xf32> to vector<8x1xf32>
    %cst_17 = arith.constant 6.400000e+01 : f32
    %46 = vector.broadcast %cst_17 : f32 to vector<8x1xf32>
    %47 = arith.divf %45, %46 : vector<8x1xf32>
    %48 = vector.broadcast %47 : vector<8x1xf32> to vector<8x64xf32>
    %49 = arith.subf %43, %48 : vector<8x64xf32>
    %50 = arith.mulf %49, %49 : vector<8x64xf32>
    %cst_18 = arith.constant dense<0.000000e+00> : vector<8xf32>
    %51 = vector.multi_reduction <add>, %50, %cst_18 [1] : vector<8x64xf32> to vector<8xf32>
    %52 = vector.shape_cast %51 : vector<8xf32> to vector<8x1xf32>
    %cst_19 = arith.constant 6.400000e+01 : f32
    %53 = vector.broadcast %cst_19 : f32 to vector<8x1xf32>
    %54 = arith.divf %52, %53 : vector<8x1xf32>
    %55 = vector.broadcast %47 : vector<8x1xf32> to vector<8x64xf32>
    %56 = arith.subf %43, %55 : vector<8x64xf32>
    %cst_20 = arith.constant 9.99999974E-6 : f32
    %57 = vector.broadcast %cst_20 : f32 to vector<8x1xf32>
    %58 = arith.addf %54, %57 : vector<8x1xf32>
    %59 = math.rsqrt %58 : vector<8x1xf32>
    %60 = vector.broadcast %59 : vector<8x1xf32> to vector<8x64xf32>
    %61 = arith.mulf %56, %60 : vector<8x64xf32>
    %c0_21 = arith.constant 0 : index
    %c0_22 = arith.constant 0 : index
    %62 = vector.load %arg3[%c0_21, %c0_22] : memref<65x128xf32, #tpu.memory_space<vmem>>, vector<64x128xf32>
    %cst_23 = arith.constant dense<0.000000e+00> : vector<8x128xf32>
    %63 = tpu.matmul %61, %62, %cst_23 {dimension_numbers = #tpu.dot_dimension_numbers<[1], [0], [0], [1], [0, 0, 1, 1], [], []>} : vector<8x64xf32>, vector<64x128xf32>, vector<8x128xf32> -> vector<8x128xf32>
    %c64 = arith.constant 64 : index
    %c0_24 = arith.constant 0 : index
    %64 = vector.load %arg3[%c64, %c0_24] : memref<65x128xf32, #tpu.memory_space<vmem>>, vector<1x128xf32>
    %65 = vector.broadcast %64 : vector<1x128xf32> to vector<8x128xf32>
    %66 = arith.addf %63, %65 : vector<8x128xf32>
    %c0_25 = arith.constant 0 : index
    %c0_26 = arith.constant 0 : index
    %67 = vector.load %arg4[%c0_25, %c0_26] : memref<8x128xf32, #tpu.memory_space<vmem>>, vector<8x128xf32>
    tpu.vector_store %arg4[%c0_25, %c0_26], %66 {strides = array<i32>} : memref<8x128xf32, #tpu.memory_space<vmem>>, vector<8x128xf32>,
    return
  }
}

</mosaic_0001>

<llo_original>
// kernel: tpu_custom_call.1
$region0: #{tpu_custom_call.1}
  #allocation0 [shape = 'u32[]', space=smem, size = 0x4, offset = 0x4, fixed_abs, tag = 'smem constant byte address 0x4 - core index']
  #allocation1 [shape = 'u32[144,128]{1,0:T(1,128)}', space=vmem, size = 0x12000, scoped, tag = 'internal scratch']
  %s0 = inlined_call_operand.vmem [shape: f32[8,128], index: 0, kind: input, shape index: {}]
  %s1 = inlined_call_operand.vmem [shape: f32[8,128], index: 1, kind: input, shape index: {}]
  %s2 = inlined_call_operand.vmem [shape: f32[257,64], index: 2, kind: input, shape index: {}]
  %s3 = inlined_call_operand.vmem [shape: f32[65,128], index: 3, kind: input, shape index: {}]
  %s4 = inlined_call_operand.hbm [shape: f32[8,128], index: 4, kind: output, shape index: {}]
  %s5 = sld [smem:[#allocation0]]
  $region26: #{tpu_custom_call.1} parent=0
    _
  %s7 = ssub.s32 1, %s5
  %s8 = scalar_select 0, %s7, %s5
  $region1: #{tpu_custom_call.1} parent=0
    #allocation2 [shape = 'u8[4096]{0}', space=vmem, size = 0x1000, scoped, tag = 'output window, operand 0, single buffered']
    #allocation3 [shape = 's32[1]{0}', space=sflag, size = 0x4, scoped, tag = 'scoped memory for tpu_custom_call.1']
    %9 = vsyncpa [#allocation3], 0
    // Predicated region
    $region2: #{tpu_custom_call.1} parent=1 // pred_check
      _
    $region3: #{tpu_custom_call.1} parent=1 // pred_check_branch
      %11 = sbr.rel (0) target = $region5
    $region4: #{tpu_custom_call.1} parent=1 // pred_region
      _
    $region5: #{tpu_custom_call.1} parent=1 // pred_fallthru
      _
    // Predicated region
    $region6: #{tpu_custom_call.1} parent=1 // pred_check
      _
    $region7: #{tpu_custom_call.1} parent=1 // pred_check_branch
      %13 = sbr.rel (0) target = $region9
    $region8: #{tpu_custom_call.1} parent=1 // pred_region
      _
    $region9: #{tpu_custom_call.1} parent=1 // pred_fallthru
      _
    // Predicated region
    $region10: #{tpu_custom_call.1} parent=1 // pred_check
      _
    $region11: #{tpu_custom_call.1} parent=1 // pred_check_branch
      %15 = sbr.rel (0) target = $region13
    $region12: #{tpu_custom_call.1} parent=1 // pred_region
      _
    $region13: #{tpu_custom_call.1} parent=1 // pred_fallthru
      _
    // Predicated region
    $region14: #{tpu_custom_call.1} parent=1 // pred_check
      _
    $region15: #{tpu_custom_call.1} parent=1 // pred_check_branch
      %17 = sbr.rel (0) target = $region17
    $region16: #{tpu_custom_call.1} parent=1 // pred_region
      _
    $region17: #{tpu_custom_call.1} parent=1 // pred_fallthru
      _
    %v18 = vld [vmem:[%s0] sm:$0xff]
    %19 = vadd.xlane.f32.xlu0 %v18
    %v20 = vpop.xlane.xlu0 %19
    %v21 = vrcp.pop 128.0
    %v22 = vmul.f32 %v20, %v21
    %v23 = vsub.f32 %v18, %v22
    %v24 = vmul.f32 %v23, %v23
    %25 = vadd.xlane.f32.xlu0 %v24
    %v26 = vpop.xlane.xlu0 %25
    %v27 = vmul.f32 %v26, %v21
    %v28 = vadd.f32 %v27, 1e-05
    %v29 = vrsqrt.pop %v28
    %v30 = vmul.f32 %v23, %v29
    %v31 = vld [vmem:[%s1] sm:$0xff]
    %32 = vadd.xlane.f32.xlu0 %v31
    %v33 = vpop.xlane.xlu0 %32
    %v34 = vmul.f32 %v33, %v21
    %v35 = vsub.f32 %v31, %v34
    %v36 = vmul.f32 %v35, %v35
    %37 = vadd.xlane.f32.xlu0 %v36
    %v38 = vpop.xlane.xlu0 %37
    %v39 = vmul.f32 %v38, %v21
    %v40 = vadd.f32 %v39, 1e-05
    %v41 = vrsqrt.pop %v40
    %v42 = vmul.f32 %v35, %v41
    %v43 = vld [vmem:[%s2] sm:$0xff]
    %v44 = vld [vmem:[%s2 + $0x8] sm:$0xff]
    %v45 = vld [vmem:[%s2 + $0x10] sm:$0xff]
    %v46 = vld [vmem:[%s2 + $0x18] sm:$0xff]
    %v47 = vld [vmem:[%s2 + $0x20] sm:$0xff]
    %v48 = vld [vmem:[%s2 + $0x28] sm:$0xff]
    %v49 = vld [vmem:[%s2 + $0x30] sm:$0xff]
    %v50 = vld [vmem:[%s2 + $0x38] sm:$0xff]
    %v51 = vld [vmem:[%s2 + $0x40] sm:$0xff]
    %v52 = vld [vmem:[%s2 + $0x48] sm:$0xff]
    %v53 = vld [vmem:[%s2 + $0x50] sm:$0xff]
    %v54 = vld [vmem:[%s2 + $0x58] sm:$0xff]
    %v55 = vld [vmem:[%s2 + $0x60] sm:$0xff]
    %v56 = vld [vmem:[%s2 + $0x68] sm:$0xff]
    %v57 = vld [vmem:[%s2 + $0x70] sm:$0xff]
    %v58 = vld [vmem:[%s2 + $0x78] sm:$0xff]
    %v59 = vld [vmem:[%s2 + $0x80] sm:$0xff]
    %v60 = vld [vmem:[%s2 + $0x88] sm:$0xff]
    %v61 = vld [vmem:[%s2 + $0x90] sm:$0xff]
    %v62 = vld [vmem:[%s2 + $0x98] sm:$0xff]
    %v63 = vld [vmem:[%s2 + $0xa0] sm:$0xff]
    %v64 = vld [vmem:[%s2 + $0xa8] sm:$0xff]
    %v65 = vld [vmem:[%s2 + $0xb0] sm:$0xff]
    %v66 = vld [vmem:[%s2 + $0xb8] sm:$0xff]
    %v67 = vld [vmem:[%s2 + $0xc0] sm:$0xff]
    %v68 = vld [vmem:[%s2 + $0xc8] sm:$0xff]
    %v69 = vld [vmem:[%s2 + $0xd0] sm:$0xff]
    %v70 = vld [vmem:[%s2 + $0xd8] sm:$0xff]
    %v71 = vld [vmem:[%s2 + $0xe0] sm:$0xff]
    %v72 = vld [vmem:[%s2 + $0xe8] sm:$0xff]
    %v73 = vld [vmem:[%s2 + $0xf0] sm:$0xff]
    %v74 = vld [vmem:[%s2 + $0xf8] sm:$0xff]
    %v75 = vld [vmem:[%s2 + $0x100] sm:$0x1]
    %v76 = vlaneseq
    %v77 = vshrl.u32 %v76, 7
    %v78 = vsub.s32 0, %v77
    %v79 = vrot.slane %v75, %v78
    %80 = vmatprep.subr.mxu0 0.0
    %81 = vmatpush1.msra.mxu0 %v43
    %82 = vmatprep.subr.mxu0 0.0
    %83 = vmatpush1.msra.mxu0 %v44
    %84 = vmatprep.subr.mxu0 0.0
    %85 = vmatpush1.msra.mxu0 %v45
    %86 = vmatprep.subr.mxu0 0.0
    %87 = vmatpush1.msra.mxu0 %v46
    %88 = vmatprep.subr.mxu0 0.0
    %89 = vmatpush1.msra.mxu0 %v47
    %90 = vmatprep.subr.mxu0 0.0
    %91 = vmatpush1.msra.mxu0 %v48
    %92 = vmatprep.subr.mxu0 0.0
    %93 = vmatpush1.msra.mxu0 %v49
    %94 = vmatprep.subr.mxu0 0.0
    %95 = vmatpush1.msra.mxu0 %v50
    %96 = vmatprep.subr.mxu0 0.0
    %97 = vmatpush1.msra.mxu0 %v51
    %98 = vmatprep.subr.mxu0 0.0
    %99 = vmatpush1.msra.mxu0 %v52
    %100 = vmatprep.subr.mxu0 0.0
    %101 = vmatpush1.msra.mxu0 %v53
    %102 = vmatprep.subr.mxu0 0.0
    %103 = vmatpush1.msra.mxu0 %v54
    %104 = vmatprep.subr.mxu0 0.0
    %105 = vmatpush1.msra.mxu0 %v55
    %106 = vmatprep.subr.mxu0 0.0
    %107 = vmatpush1.msra.mxu0 %v56
    %108 = vmatprep.subr.mxu0 0.0
    %109 = vmatpush1.msra.mxu0 %v57
    %110 = vmatprep.subr.mxu0 0.0
    %111 = vmatpush1.msra.mxu0 %v58
    %112 = vmatprep.subr.mxu0 0.0
    %113 = vmatpush1.msra.mxu0 %v59
    %114 = vmatprep.subr.mxu0 0.0
    %115 = vmatpush1.msra.mxu0 %v60
    %116 = vmatprep.subr.mxu0 0.0
    %117 = vmatpush1.msra.mxu0 %v61
    %118 = vmatprep.subr.mxu0 0.0
    %119 = vmatpush1.msra.mxu0 %v62
    %120 = vmatprep.subr.mxu0 0.0
    %121 = vmatpush1.msra.mxu0 %v63
    %122 = vmatprep.subr.mxu0 0.0
    %123 = vmatpush1.msra.mxu0 %v64
    %124 = vmatprep.subr.mxu0 0.0
    %125 = vmatpush1.msra.mxu0 %v65
    %126 = vmatprep.subr.mxu0 0.0
    %127 = vmatpush1.msra.mxu0 %v66
    %128 = vmatprep.subr.mxu0 0.0
    %129 = vmatpush1.msra.mxu0 %v67
    %130 = vmatprep.subr.mxu0 0.0
    %131 = vmatpush1.msra.mxu0 %v68
    %132 = vmatprep.subr.mxu0 0.0
    %133 = vmatpush1.msra.mxu0 %v69
    %134 = vmatprep.subr.mxu0 0.0
    %135 = vmatpush1.msra.mxu0 %v70
    %136 = vmatprep.subr.mxu0 0.0
    %137 = vmatpush1.msra.mxu0 %v71
    %138 = vmatprep.subr.mxu0 0.0
    %139 = vmatpush1.msra.mxu0 %v72
    %140 = vmatprep.subr.mxu0 0.0
    %141 = vmatpush1.msra.mxu0 %v73
    %142 = vmatprep.subr.mxu0 0.0
    %143 = vmatpush1.msra.mxu0 %v74
    %144 = vmatprep.mubr.f32.mxu0 %v42
    %145 = vmatmul.mubr.f32.gmra.mrb[0].mxu0 %v30
    %v146 = vpop.f32.mrb[0].mxu0
    %v147 = vadd.f32 %v79, %v146
    %v148 = vpop.f32.mrb[0].mxu0
    %149 = vdwg.mxu0
    %vm150 = vcmask 523264
    %v151 = vsel %vm150, %v147, 0.0
    %152 = vadd.xlane.f32.xlu0 %v151
    %v153 = vpop.xlane.xlu0 %152
    %v154 = vrcp.pop 64.0
    %v155 = vmul.f32 %v153, %v154
    %v156 = vsub.f32 %v147, %v155
    %v157 = vmul.f32 %v156, %v156
    %v158 = vsel %vm150, %v157, 0.0
    %159 = vadd.xlane.f32.xlu0 %v158
    %v160 = vpop.xlane.xlu0 %159
    %v161 = vmul.f32 %v160, %v154
    %v162 = vadd.f32 %v161, 1e-05
    %v163 = vrsqrt.pop %v162
    %v164 = vmul.f32 %v156, %v163
    %v165 = vld [vmem:[%s3] sm:$0xff]
    %v166 = vld [vmem:[%s3 + $0x8] sm:$0xff]
    %v167 = vld [vmem:[%s3 + $0x10] sm:$0xff]
    %v168 = vld [vmem:[%s3 + $0x18] sm:$0xff]
    %v169 = vld [vmem:[%s3 + $0x20] sm:$0xff]
    %v170 = vld [vmem:[%s3 + $0x28] sm:$0xff]
    %v171 = vld [vmem:[%s3 + $0x30] sm:$0xff]
    %v172 = vld [vmem:[%s3 + $0x38] sm:$0xff]
    %v173 = vld [vmem:[%s3 + $0x40] sm:$0x1]
    %v174 = vlaneseq
    %v175 = vshrl.u32 %v174, 7
    %v176 = vsub.s32 0, %v175
    %v177 = vrot.slane %v173, %v176
    %v179 = vsel %vm150, %v164, 0
    %181 = vmatprep.subr.mxu0 0.0
    %182 = vmatpush1.msra.mxu0 %v165
    %183 = vmatprep.subr.mxu0 0.0
    %184 = vmatpush1.msra.mxu0 %v166
    %185 = vmatprep.subr.mxu0 0.0
    %186 = vmatpush1.msra.mxu0 %v167
    %187 = vmatprep.subr.mxu0 0.0
    %188 = vmatpush1.msra.mxu0 %v168
    %189 = vmatprep.subr.mxu0 0.0
    %190 = vmatpush1.msra.mxu0 %v169
    %191 = vmatprep.subr.mxu0 0.0
    %192 = vmatpush1.msra.mxu0 %v170
    %193 = vmatprep.subr.mxu0 0.0
    %194 = vmatpush1.msra.mxu0 %v171
    %195 = vmatprep.subr.mxu0 0.0
    %196 = vmatpush1.msra.mxu0 %v172
    %197 = vmatprep.subr.mxu0 0.0
    %198 = vmatpush1.msra.mxu0 0.0
    %199 = vmatprep.subr.mxu0 0.0
    %200 = vmatpush1.msra.mxu0 0.0
    %201 = vmatprep.subr.mxu0 0.0
    %202 = vmatpush1.msra.mxu0 0.0
    %203 = vmatprep.subr.mxu0 0.0
    %204 = vmatpush1.msra.mxu0 0.0
    %205 = vmatprep.subr.mxu0 0.0
    %206 = vmatpush1.msra.mxu0 0.0
    %207 = vmatprep.subr.mxu0 0.0
    %208 = vmatpush1.msra.mxu0 0.0
    %209 = vmatprep.subr.mxu0 0.0
    %210 = vmatpush1.msra.mxu0 0.0
    %211 = vmatprep.subr.mxu0 0.0
    %212 = vmatpush1.msra.mxu0 0.0
    %213 = vmatprep.subr.mxu0 0.0
    %214 = vmatpush1.msra.mxu0 0.0
    %215 = vmatprep.subr.mxu0 0.0
    %216 = vmatpush1.msra.mxu0 0.0
    %217 = vmatprep.subr.mxu0 0.0
    %218 = vmatpush1.msra.mxu0 0.0
    %219 = vmatprep.subr.mxu0 0.0
    %220 = vmatpush1.msra.mxu0 0.0
    %221 = vmatprep.subr.mxu0 0.0
    %222 = vmatpush1.msra.mxu0 0.0
    %223 = vmatprep.subr.mxu0 0.0
    %224 = vmatpush1.msra.mxu0 0.0
    %225 = vmatprep.subr.mxu0 0.0
    %226 = vmatpush1.msra.mxu0 0.0
    %227 = vmatprep.subr.mxu0 0.0
    %228 = vmatpush1.msra.mxu0 0.0
    %229 = vmatprep.subr.mxu0 0.0
    %230 = vmatpush1.msra.mxu0 0.0
    %231 = vmatprep.subr.mxu0 0.0
    %232 = vmatpush1.msra.mxu0 0.0
    %233 = vmatprep.subr.mxu0 0.0
    %234 = vmatpush1.msra.mxu0 0.0
    %235 = vmatprep.subr.mxu0 0.0
    %236 = vmatpush1.msra.mxu0 0.0
    %237 = vmatprep.subr.mxu0 0.0
    %238 = vmatpush1.msra.mxu0 0.0
    %239 = vmatprep.subr.mxu0 0.0
    %240 = vmatpush1.msra.mxu0 0.0
    %241 = vmatprep.subr.mxu0 0.0
    %242 = vmatpush1.msra.mxu0 0.0
    %243 = vmatprep.subr.mxu0 0.0
    %244 = vmatpush1.msra.mxu0 0.0
    %245 = vmatprep.mubr.f32.mxu0 0.0
    %246 = vmatmul.mubr.f32.gmra.mrb[0].mxu0 %v179
    %v247 = vpop.f32.mrb[0].mxu0
    %v248 = vadd.f32 %v177, %v247
    %v249 = vpop.f32.mrb[0].mxu0
    %250 = vdwg.mxu0
    %251 = vst [vmem:[#allocation2] sm:$0xff] %v248
    // Predicated region
    $region18: #{tpu_custom_call.1} parent=1 // pred_check
      _
    $region19: #{tpu_custom_call.1} parent=1 // pred_check_branch
      %253 = sbr.rel (0) target = $region21
    $region20: #{tpu_custom_call.1} parent=1 // pred_region
      %s255 = ssub.s32 128, 128
      %256 = vsyncadd [#allocation3], %s255
      %s258 = sshll.u32 [#allocation2], 4
      %s259 = int_to_ptr.vmem [resolvable:$true] %s258
      %261 = dma.vmem_to_hbm [thread:$0]  %s259, 128, %s4, [#allocation3]
    $region21: #{tpu_custom_call.1} parent=1 // pred_fallthru
      _
    // Predicated region
    $region22: #{tpu_custom_call.1} parent=1 // pred_check
      _
    $region23: #{tpu_custom_call.1} parent=1 // pred_check_branch
      %263 = sbr.rel (0) target = $region25
    $region24: #{tpu_custom_call.1} parent=1 // pred_region
      %264 = dma.done [#allocation3], 128
    $region25: #{tpu_custom_call.1} parent=1 // pred_fallthru
      _
    %265 = vsyncpa [#allocation3], 1

</llo_original>
